<compile_context>
chip_gen: v6e
topology: v6e:2x2x1
jax: 0.10.0
libtpu: 0.0.40
codegen_flags: <defaults>
</compile_context>

<pallas_src>
import functools

import jax
import jax.numpy as jnp
from jax.experimental import pallas as pl
from jax.experimental.pallas import tpu as pltpu


def _round_up(n: int, m: int) -> int:
    return ((n + m - 1) // m) * m


def policy_net_kernel(x_ref, w1_ref, b1_ref, w2_ref, b2_ref, out_ref):
    # fc1: x @ W1 + b1, ReLU  (bf16 MXU matmul, f32 accumulation; bias/ReLU in f32)
    x = x_ref[...]                                                    # (TB, S_pad) bf16
    h = jnp.dot(x, w1_ref[...], preferred_element_type=jnp.float32)  # (TB, H_pad) f32
    h = jnp.maximum(h + b1_ref[...], 0.0)

    # fc2: h @ W2 + b2.  Padded action columns of W2 are zero and the matching
    # b2 entries are -1e30, so padded logits are -1e30 and vanish in the softmax.
    logits = jnp.dot(h.astype(jnp.bfloat16), w2_ref[...],
                     preferred_element_type=jnp.float32)             # (TB, A_pad) f32
    logits = logits + b2_ref[...]

    # softmax over the action axis (dim=1 of the 2-D input in the PyTorch module)
    m = jnp.max(logits, axis=-1, keepdims=True)                      # XLU reduce
    e = jnp.exp(logits - m)                                          # EUP
    denom = jnp.sum(e, axis=-1, keepdims=True)
    out_ref[...] = e * pl.reciprocal(denom, approx=True)             # divide -> EUP


def pad_params(w1, b1, w2, b2):
    """Pad weights/biases to lane-dense (multiple-of-128) shapes ONCE and cast
    matmul weights to bf16.  Padded b2 columns carry -1e30 so padded logits are
    excluded from the softmax without any per-tile masking in the kernel."""
    S, H = w1.shape
    A = w2.shape[1]
    S_pad, H_pad, A_pad = _round_up(S, 128), _round_up(H, 128), _round_up(A, 128)
    w1p = jnp.zeros((S_pad, H_pad), jnp.bfloat16).at[:S, :H].set(w1.astype(jnp.bfloat16))
    b1p = jnp.zeros((1, H_pad), jnp.float32).at[:, :H].set(b1.astype(jnp.float32))
    w2p = jnp.zeros((H_pad, A_pad), jnp.bfloat16).at[:H, :A].set(w2.astype(jnp.bfloat16))
    b2p = jnp.full((1, A_pad), -1e30, jnp.float32).at[:, :A].set(b2.astype(jnp.float32))
    return w1p, b1p, w2p, b2p


@functools.partial(jax.jit, static_argnames=("action_dim",))
def policy_net_forward(x, w1p, b1p, w2p, b2p, *, action_dim):
    """x: [B, state_dim] f32; padded params from pad_params -> probs [B, action_dim] f32."""
    B, S = x.shape
    S_pad, H_pad = w1p.shape
    A_pad = w2p.shape[1]

    # Batch tile: multiple of 16 (bf16 sublane packing), capped at 512 rows.
    TB = min(512, _round_up(B, 16))
    B_pad = _round_up(B, TB)

    # Pad + cast the activations (zeros in padded rows/cols are harmless).
    xp = jnp.zeros((B_pad, S_pad), jnp.bfloat16).at[:B, :S].set(x.astype(jnp.bfloat16))

    cost = pl.CostEstimate(
        flops=2 * B_pad * (S_pad * H_pad + H_pad * A_pad),
        transcendentals=B_pad * A_pad,
        bytes_accessed=(B_pad * S_pad * 2          # x (bf16)
                        + S_pad * H_pad * 2        # w1 (bf16)
                        + H_pad * A_pad * 2        # w2 (bf16)
                        + (H_pad + A_pad) * 4      # biases (f32)
                        + B_pad * A_pad * 4),      # out (f32)
    )

    out = pl.pallas_call(
        policy_net_kernel,
        out_shape=jax.ShapeDtypeStruct((B_pad, A_pad), jnp.float32),
        grid_spec=pltpu.PrefetchScalarGridSpec(
            num_scalar_prefetch=0,
            grid=(B_pad // TB,),
            in_specs=[
                pl.BlockSpec((TB, S_pad), lambda i: (i, 0)),      # x tile
                pl.BlockSpec((S_pad, H_pad), lambda i: (0, 0)),   # w1 (resident)
                pl.BlockSpec((1, H_pad), lambda i: (0, 0)),       # b1
                pl.BlockSpec((H_pad, A_pad), lambda i: (0, 0)),   # w2 (resident)
                pl.BlockSpec((1, A_pad), lambda i: (0, 0)),       # b2 (padded cols = -1e30)
            ],
            out_specs=pl.BlockSpec((TB, A_pad), lambda i: (i, 0)),
        ),
        compiler_params=pltpu.CompilerParams(
            dimension_semantics=("parallel",),   # shard batch tiles across TCs on v7x
        ),
        cost_estimate=cost,
    )(xp, w1p, b1p, w2p, b2p)

    return out[:B, :action_dim]


def init_params(key, state_dim, hidden_dim, action_dim):
    """Deterministic init mimicking torch.nn.Linear's U(-1/sqrt(fan_in), +1/sqrt(fan_in))."""
    k1, k2, k3, k4 = jax.random.split(key, 4)
    bound1 = 1.0 / jnp.sqrt(state_dim)
    bound2 = 1.0 / jnp.sqrt(hidden_dim)
    w1 = jax.random.uniform(k1, (state_dim, hidden_dim), jnp.float32, -bound1, bound1)
    b1 = jax.random.uniform(k2, (1, hidden_dim), jnp.float32, -bound1, bound1)
    w2 = jax.random.uniform(k3, (hidden_dim, action_dim), jnp.float32, -bound2, bound2)
    b2 = jax.random.uniform(k4, (1, action_dim), jnp.float32, -bound2, bound2)
    return w1, b1, w2, b2


if __name__ == "__main__":
    # Small shapes consistent with PolicyNet(state_dim, hidden_dim, action_dim)
    B, STATE_DIM, HIDDEN_DIM, ACTION_DIM = 8, 16, 32, 4

    key = jax.random.PRNGKey(0)
    kx, kp = jax.random.split(key)
    x = jax.random.normal(kx, (B, STATE_DIM), jnp.float32)
    w1, b1, w2, b2 = init_params(kp, STATE_DIM, HIDDEN_DIM, ACTION_DIM)

    # Pad/cast the weights once (outside the per-call path).
    w1p, b1p, w2p, b2p = pad_params(w1, b1, w2, b2)

    probs = policy_net_forward(x, w1p, b1p, w2p, b2p, action_dim=ACTION_DIM)
    probs = jax.block_until_ready(probs)
    assert probs.shape == (B, ACTION_DIM)

    # Reference 1: same bf16-matmul / f32-accumulate path in plain JAX (tight check).
    xb = x.astype(jnp.bfloat16)
    h_bf = jnp.maximum(
        jnp.dot(xb, w1.astype(jnp.bfloat16), preferred_element_type=jnp.float32) + b1, 0.0)
    logits_bf = jnp.dot(h_bf.astype(jnp.bfloat16), w2.astype(jnp.bfloat16),
                        preferred_element_type=jnp.float32) + b2
    ref_bf = jax.nn.softmax(logits_bf, axis=1)
    assert jnp.allclose(probs, ref_bf, atol=5e-3, rtol=5e-3)

    # Reference 2: full-f32 PyTorch-equivalent forward (semantics check, looser tol).
    h_f32 = jnp.maximum(x @ w1 + b1, 0.0)
    ref_f32 = jax.nn.softmax(h_f32 @ w2 + b2, axis=1)
    assert jnp.allclose(probs, ref_f32, atol=3e-2, rtol=3e-2)

    # Valid probability distribution over the real actions.
    assert jnp.allclose(jnp.sum(probs, axis=1), 1.0, atol=5e-3)

    print("KERNEL_OK")
</pallas_src>

<mosaic_0001>
module attributes {stable_mosaic.version = 11 : i64} {
  func.func @policy_net_kernel(%arg0: i32, %arg1: memref<16x128xbf16, #tpu.memory_space<vmem>>, %arg2: memref<128x128xbf16, #tpu.memory_space<vmem>>, %arg3: memref<1x128xf32, #tpu.memory_space<vmem>>, %arg4: memref<128x128xbf16, #tpu.memory_space<vmem>>, %arg5: memref<1x128xf32, #tpu.memory_space<vmem>>, %arg6: memref<16x128xf32, #tpu.memory_space<vmem>>) attributes {dimension_semantics = [#tpu.dimension_semantics<parallel>], iteration_bounds = array<i64: 1>, scalar_prefetch = 0 : i64, scratch_operands = 0 : i64, tpu.core_type = #tpu.core_type<tc>, window_params = [{transform_indices = @transform_0, window_bounds = array<i64: 16, 128>}, {pipeline_mode = #tpu.pipeline_mode<synchronous>, transform_indices = @transform_1, window_bounds = array<i64: 128, 128>}, {pipeline_mode = #tpu.pipeline_mode<synchronous>, transform_indices = @transform_2, window_bounds = array<i64: 1, 128>}, {pipeline_mode = #tpu.pipeline_mode<synchronous>, transform_indices = @transform_3, window_bounds = array<i64: 128, 128>}, {pipeline_mode = #tpu.pipeline_mode<synchronous>, transform_indices = @transform_4, window_bounds = array<i64: 1, 128>}, {transform_indices = @transform_5, window_bounds = array<i64: 16, 128>}]} {
    %c0 = arith.constant 0 : index
    %c0_0 = arith.constant 0 : index
    %0 = vector.load %arg1[%c0, %c0_0] : memref<16x128xbf16, #tpu.memory_space<vmem>>, vector<16x128xbf16>
    %c0_1 = arith.constant 0 : index
    %c0_2 = arith.constant 0 : index
    %1 = vector.load %arg2[%c0_1, %c0_2] : memref<128x128xbf16, #tpu.memory_space<vmem>>, vector<128x128xbf16>
    %cst = arith.constant dense<0.000000e+00> : vector<16x128xf32>
    %2 = tpu.matmul %0, %1, %cst {dimension_numbers = #tpu.dot_dimension_numbers<[1], [0], [0], [1], [0, 0, 1, 1], [], []>} : vector<16x128xbf16>, vector<128x128xbf16>, vector<16x128xf32> -> vector<16x128xf32>
    %c0_3 = arith.constant 0 : index
    %c0_4 = arith.constant 0 : index
    %3 = vector.load %arg3[%c0_3, %c0_4] : memref<1x128xf32, #tpu.memory_space<vmem>>, vector<1x128xf32>
    %4 = vector.broadcast %3 : vector<1x128xf32> to vector<16x128xf32>
    %5 = arith.addf %2, %4 : vector<16x128xf32>
    %cst_5 = arith.constant 0.000000e+00 : f32
    %6 = vector.broadcast %cst_5 : f32 to vector<16x128xf32>
    %7 = arith.maximumf %5, %6 : vector<16x128xf32>
    %8 = arith.truncf %7 : vector<16x128xf32> to vector<16x128xbf16>
    %c0_6 = arith.constant 0 : index
    %c0_7 = arith.constant 0 : index
    %9 = vector.load %arg4[%c0_6, %c0_7] : memref<128x128xbf16, #tpu.memory_space<vmem>>, vector<128x128xbf16>
    %cst_8 = arith.constant dense<0.000000e+00> : vector<16x128xf32>
    %10 = tpu.matmul %8, %9, %cst_8 {dimension_numbers = #tpu.dot_dimension_numbers<[1], [0], [0], [1], [0, 0, 1, 1], [], []>} : vector<16x128xbf16>, vector<128x128xbf16>, vector<16x128xf32> -> vector<16x128xf32>
    %c0_9 = arith.constant 0 : index
    %c0_10 = arith.constant 0 : index
    %11 = vector.load %arg5[%c0_9, %c0_10] : memref<1x128xf32, #tpu.memory_space<vmem>>, vector<1x128xf32>
    %12 = vector.broadcast %11 : vector<1x128xf32> to vector<16x128xf32>
    %13 = arith.addf %10, %12 : vector<16x128xf32>
    %cst_11 = arith.constant dense<0xFF800000> : vector<16xf32>
    %14 = vector.multi_reduction <maximumf>, %13, %cst_11 [1] : vector<16x128xf32> to vector<16xf32>
    %15 = vector.shape_cast %14 : vector<16xf32> to vector<16x1xf32>
    %16 = vector.broadcast %15 : vector<16x1xf32> to vector<16x128xf32>
    %17 = arith.subf %13, %16 : vector<16x128xf32>
    %18 = math.exp %17 : vector<16x128xf32>
    %cst_12 = arith.constant dense<0.000000e+00> : vector<16xf32>
    %19 = vector.multi_reduction <add>, %18, %cst_12 [1] : vector<16x128xf32> to vector<16xf32>
    %20 = vector.shape_cast %19 : vector<16xf32> to vector<16x1xf32>
    %21 = tpu.reciprocal %20 {approx = true} : vector<16x1xf32> -> vector<16x1xf32>
    %22 = vector.broadcast %21 : vector<16x1xf32> to vector<16x128xf32>
    %23 = arith.mulf %18, %22 : vector<16x128xf32>
    %c0_13 = arith.constant 0 : index
    %c0_14 = arith.constant 0 : index
    %24 = vector.load %arg6[%c0_13, %c0_14] : memref<16x128xf32, #tpu.memory_space<vmem>>, vector<16x128xf32>
    tpu.vector_store %arg6[%c0_13, %c0_14], %23 {strides = array<i32>} : memref<16x128xf32, #tpu.memory_space<vmem>>, vector<16x128xf32>,
    return
  }
  func.func @transform_0(%arg0: i32) -> (i32, i32) {
    %c0_i32 = arith.constant 0 : i32
    %c0_i32_0 = arith.constant 0 : i32
    return %arg0, %c0_i32 : i32, i32
  }
  func.func @transform_1(%arg0: i32) -> (i32, i32) {
    %c0_i32 = arith.constant 0 : i32
    %c0_i32_0 = arith.constant 0 : i32
    %c0_i32_1 = arith.constant 0 : i32
    return %c0_i32, %c0_i32_0 : i32, i32
  }
  func.func @transform_2(%arg0: i32) -> (i32, i32) {
    %c0_i32 = arith.constant 0 : i32
    %c0_i32_0 = arith.constant 0 : i32
    %c0_i32_1 = arith.constant 0 : i32
    return %c0_i32, %c0_i32_0 : i32, i32
  }
  func.func @transform_3(%arg0: i32) -> (i32, i32) {
    %c0_i32 = arith.constant 0 : i32
    %c0_i32_0 = arith.constant 0 : i32
    %c0_i32_1 = arith.constant 0 : i32
    return %c0_i32, %c0_i32_0 : i32, i32
  }
  func.func @transform_4(%arg0: i32) -> (i32, i32) {
    %c0_i32 = arith.constant 0 : i32
    %c0_i32_0 = arith.constant 0 : i32
    %c0_i32_1 = arith.constant 0 : i32
    return %c0_i32, %c0_i32_0 : i32, i32
  }
  func.func @transform_5(%arg0: i32) -> (i32, i32) {
    %c0_i32 = arith.constant 0 : i32
    %c0_i32_0 = arith.constant 0 : i32
    return %arg0, %c0_i32 : i32, i32
  }
}

</mosaic_0001>

<llo_original>
// kernel: policy_net_forward.1
$region0: #{policy_net_forward.1}
  #allocation0 [shape = 'u32[]', space=smem, size = 0x4, offset = 0x4, fixed_abs, tag = 'smem constant byte address 0x4 - core index']
  #allocation1 [shape = 'u32[144,128]{1,0:T(1,128)}', space=vmem, size = 0x12000, scoped, tag = 'internal scratch']
  %s0 = inlined_call_operand.vmem [shape: bf16[16,128], index: 0, kind: input, shape index: {}]
  %s1 = inlined_call_operand.hbm [shape: bf16[128,128], index: 1, kind: input, shape index: {}]
  %s2 = inlined_call_operand.vmem [shape: f32[1,128], index: 2, kind: input, shape index: {}]
  %s3 = inlined_call_operand.hbm [shape: bf16[128,128], index: 3, kind: input, shape index: {}]
  %s4 = inlined_call_operand.vmem [shape: f32[1,128], index: 4, kind: input, shape index: {}]
  %s5 = inlined_call_operand.vmem [shape: f32[16,128], index: 5, kind: output, shape index: {}]
  %s6 = sld [smem:[#allocation0]]
  $region38: #{policy_net_forward.1} parent=0
    _
  %s8 = ssub.s32 1, %s6
  %s9 = scalar_select 0, %s8, %s6
  $region1: #{policy_net_forward.1} parent=0
    #allocation2 [shape = 'u8[32768]{0}', space=vmem, size = 0x8000, scoped, tag = 'input window, operand 1, single buffered']
    #allocation3 [shape = 's32[1]{0}', space=sflag, size = 0x4, scoped, tag = 'scoped memory for policy_net_forward.1']
    #allocation4 [shape = 'u8[32768]{0}', space=vmem, size = 0x8000, scoped, tag = 'input window, operand 3, single buffered']
    #allocation5 [shape = 's32[1]{0}', space=sflag, size = 0x4, scoped, tag = 'scoped memory for policy_net_forward.1']
    %10 = vsyncpa [#allocation3], 0
    %11 = vsyncpa [#allocation5], 0
    // Predicated region
    $region2: #{policy_net_forward.1} parent=1 // pred_check
      _
    $region3: #{policy_net_forward.1} parent=1 // pred_check_branch
      %13 = sbr.rel (0) target = $region5
    $region4: #{policy_net_forward.1} parent=1 // pred_region
      _
    $region5: #{policy_net_forward.1} parent=1 // pred_fallthru
      _
    // Predicated region
    $region6: #{policy_net_forward.1} parent=1 // pred_check
      _
    $region7: #{policy_net_forward.1} parent=1 // pred_check_branch
      %15 = sbr.rel (0) target = $region9
    $region8: #{policy_net_forward.1} parent=1 // pred_region
      %s17 = ssub.s32 1024, 1024
      %18 = vsyncadd [#allocation3], %s17
      %s19 = sshll.u32 [#allocation2], 4
      %s20 = int_to_ptr.vmem [resolvable:$true] %s19
      %25 = dma.hbm_to_vmem [thread:$0]  %s1, 1024, %s20, [#allocation3], 64, 64, 4
    $region9: #{policy_net_forward.1} parent=1 // pred_fallthru
      _
    // Predicated region
    $region10: #{policy_net_forward.1} parent=1 // pred_check
      _
    $region11: #{policy_net_forward.1} parent=1 // pred_check_branch
      %27 = sbr.rel (0) target = $region13
    $region12: #{policy_net_forward.1} parent=1 // pred_region
      _
    $region13: #{policy_net_forward.1} parent=1 // pred_fallthru
      _
    // Predicated region
    $region14: #{policy_net_forward.1} parent=1 // pred_check
      _
    $region15: #{policy_net_forward.1} parent=1 // pred_check_branch
      %29 = sbr.rel (0) target = $region17
    $region16: #{policy_net_forward.1} parent=1 // pred_region
      %s31 = ssub.s32 1024, 1024
      %32 = vsyncadd [#allocation5], %s31
      %s33 = sshll.u32 [#allocation4], 4
      %s34 = int_to_ptr.vmem [resolvable:$true] %s33
      %39 = dma.hbm_to_vmem [thread:$0]  %s3, 1024, %s34, [#allocation5], 64, 64, 4
    $region17: #{policy_net_forward.1} parent=1 // pred_fallthru
      _
    // Predicated region
    $region18: #{policy_net_forward.1} parent=1 // pred_check
      _
    $region19: #{policy_net_forward.1} parent=1 // pred_check_branch
      %41 = sbr.rel (0) target = $region21
    $region20: #{policy_net_forward.1} parent=1 // pred_region
      _
    $region21: #{policy_net_forward.1} parent=1 // pred_fallthru
      _
    // Predicated region
    $region22: #{policy_net_forward.1} parent=1 // pred_check
      _
    $region23: #{policy_net_forward.1} parent=1 // pred_check_branch
      %43 = sbr.rel (0) target = $region25
    $region24: #{policy_net_forward.1} parent=1 // pred_region
      %44 = dma.done [#allocation3], 1024
    $region25: #{policy_net_forward.1} parent=1 // pred_fallthru
      _
    // Predicated region
    $region26: #{policy_net_forward.1} parent=1 // pred_check
      _
    $region27: #{policy_net_forward.1} parent=1 // pred_check_branch
      %46 = sbr.rel (0) target = $region29
    $region28: #{policy_net_forward.1} parent=1 // pred_region
      %47 = dma.done [#allocation5], 1024
    $region29: #{policy_net_forward.1} parent=1 // pred_fallthru
      _
    %v49 = vld [vmem:[%s0] sm:$0xf]
    %v50 = vld [vmem:[%s0 + $0x4] sm:$0xf]
    %v51 = vld [vmem:[#allocation2] sm:$0xf]
    %v52 = vld [vmem:[#allocation2 + $0x4] sm:$0xf]
    %v53 = vld [vmem:[#allocation2 + $0x8] sm:$0xf]
    %v54 = vld [vmem:[#allocation2 + $0xc] sm:$0xf]
    %v55 = vld [vmem:[#allocation2 + $0x10] sm:$0xf]
    %v56 = vld [vmem:[#allocation2 + $0x14] sm:$0xf]
    %v57 = vld [vmem:[#allocation2 + $0x18] sm:$0xf]
    %v58 = vld [vmem:[#allocation2 + $0x1c] sm:$0xf]
    %v59 = vld [vmem:[#allocation2 + $0x20] sm:$0xf]
    %v60 = vld [vmem:[#allocation2 + $0x24] sm:$0xf]
    %v61 = vld [vmem:[#allocation2 + $0x28] sm:$0xf]
    %v62 = vld [vmem:[#allocation2 + $0x2c] sm:$0xf]
    %v63 = vld [vmem:[#allocation2 + $0x30] sm:$0xf]
    %v64 = vld [vmem:[#allocation2 + $0x34] sm:$0xf]
    %v65 = vld [vmem:[#allocation2 + $0x38] sm:$0xf]
    %v66 = vld [vmem:[#allocation2 + $0x3c] sm:$0xf]
    %v67 = vld [vmem:[%s2] sm:$0x1]
    %v69 = vlaneseq
    %v70 = vshrl.u32 %v69, 7
    %v71 = vsub.s32 0, %v70
    %v72 = vrot.slane %v67, %v71
    %v76 = vunpack.c.l.b16 %v49
    %v77 = vunpack.c.l.b16 %v50
    %v78 = vpack.c.b16 %v77, %v76
    %v96 = vunpack.c.l.b16 %v51
    %v97 = vunpack.c.l.b16 %v52
    %v98 = vunpack.c.l.b16 %v53
    %v99 = vunpack.c.l.b16 %v54
    %v100 = vunpack.c.l.b16 %v55
    %v101 = vunpack.c.l.b16 %v56
    %v102 = vunpack.c.l.b16 %v57
    %v103 = vunpack.c.l.b16 %v58
    %v104 = vunpack.c.l.b16 %v59
    %v105 = vunpack.c.l.b16 %v60
    %v106 = vunpack.c.l.b16 %v61
    %v107 = vunpack.c.l.b16 %v62
    %v108 = vunpack.c.l.b16 %v63
    %v109 = vunpack.c.l.b16 %v64
    %v110 = vunpack.c.l.b16 %v65
    %v111 = vunpack.c.l.b16 %v66
    %v112 = vpack.c.b16 %v97, %v96
    %v113 = vpack.c.b16 %v99, %v98
    %v114 = vpack.c.b16 %v101, %v100
    %v115 = vpack.c.b16 %v103, %v102
    %v116 = vpack.c.b16 %v105, %v104
    %v117 = vpack.c.b16 %v107, %v106
    %v118 = vpack.c.b16 %v109, %v108
    %v119 = vpack.c.b16 %v111, %v110
    %128 = vmatprep.subr.bf16.mxu0 0
    %129 = vmatpush1.bf16.msra.mxu0 %v119
    %130 = vmatprep.subr.bf16.mxu0 0
    %131 = vmatpush1.bf16.msra.mxu0 %v118
    %132 = vmatprep.subr.bf16.mxu0 0
    %133 = vmatpush1.bf16.msra.mxu0 %v117
    %134 = vmatprep.subr.bf16.mxu0 0
    %135 = vmatpush1.bf16.msra.mxu0 %v116
    %136 = vmatprep.subr.bf16.mxu0 0
    %137 = vmatpush1.bf16.msra.mxu0 %v115
    %138 = vmatprep.subr.bf16.mxu0 0
    %139 = vmatpush1.bf16.msra.mxu0 %v114
    %140 = vmatprep.subr.bf16.mxu0 0
    %141 = vmatpush1.bf16.msra.mxu0 %v113
    %142 = vmatprep.subr.bf16.mxu0 0
    %143 = vmatpush1.bf16.msra.mxu0 %v112
    %144 = vmatprep.subr.bf16.mxu0 0
    %145 = vmatpush2.bf16.msra.mxu0 0
    %146 = vmatprep.subr.bf16.mxu0 0
    %147 = vmatpush2.bf16.msra.mxu0 0
    %148 = vmatprep.subr.bf16.mxu0 0
    %149 = vmatpush2.bf16.msra.mxu0 0
    %150 = vmatprep.subr.bf16.mxu0 0
    %151 = vmatpush2.bf16.msra.mxu0 0
    %152 = vmatprep.subr.bf16.mxu0 0
    %153 = vmatpush2.bf16.msra.mxu0 0
    %154 = vmatprep.subr.bf16.mxu0 0
    %155 = vmatpush2.bf16.msra.mxu0 0
    %156 = vmatprep.subr.bf16.mxu0 0
    %157 = vmatpush2.bf16.msra.mxu0 0
    %158 = vmatprep.subr.bf16.mxu0 0
    %159 = vmatpush2.bf16.msra.mxu0 0
    %160 = vmatprep.mubr.bf16.mxu0 0
    %161 = vmatmul.mubr.bf16.gmra.mxu0 %v78
    %v162 = vpop.f32.mrf.mxu0
    %v163 = vadd.f32 %v72, %v162
    %v164 = vpop.f32.mrf.mxu0
    %v165 = vpop.f32.mrf.mxu0
    %v166 = vadd.f32 %v72, %v165
    %v167 = vpop.f32.mrf.mxu0
    %168 = vdwg.mxu0
    %v169 = vmax.f32 %v163, 0.0
    %v170 = vmax.f32 %v166, 0.0
    %v171 = vpack.c.bf16 %v170, %v169
    %v172 = vld [vmem:[#allocation4] sm:$0xf]
    %v173 = vld [vmem:[#allocation4 + $0x4] sm:$0xf]
    %v174 = vld [vmem:[#allocation4 + $0x8] sm:$0xf]
    %v175 = vld [vmem:[#allocation4 + $0xc] sm:$0xf]
    %v176 = vld [vmem:[#allocation4 + $0x10] sm:$0xf]
    %v177 = vld [vmem:[#allocation4 + $0x14] sm:$0xf]
    %v178 = vld [vmem:[#allocation4 + $0x18] sm:$0xf]
    %v179 = vld [vmem:[#allocation4 + $0x1c] sm:$0xf]
    %v180 = vld [vmem:[#allocation4 + $0x20] sm:$0xf]
    %v181 = vld [vmem:[#allocation4 + $0x24] sm:$0xf]
    %v182 = vld [vmem:[#allocation4 + $0x28] sm:$0xf]
    %v183 = vld [vmem:[#allocation4 + $0x2c] sm:$0xf]
    %v184 = vld [vmem:[#allocation4 + $0x30] sm:$0xf]
    %v185 = vld [vmem:[#allocation4 + $0x34] sm:$0xf]
    %v186 = vld [vmem:[#allocation4 + $0x38] sm:$0xf]
    %v187 = vld [vmem:[#allocation4 + $0x3c] sm:$0xf]
    %v188 = vld [vmem:[%s4] sm:$0x1]
    %v190 = vlaneseq
    %v191 = vshrl.u32 %v190, 7
    %v192 = vsub.s32 0, %v191
    %v193 = vrot.slane %v188, %v192
    %v211 = vunpack.c.l.b16 %v172
    %v212 = vunpack.c.l.b16 %v173
    %v213 = vunpack.c.l.b16 %v174
    %v214 = vunpack.c.l.b16 %v175
    %v215 = vunpack.c.l.b16 %v176
    %v216 = vunpack.c.l.b16 %v177
    %v217 = vunpack.c.l.b16 %v178
    %v218 = vunpack.c.l.b16 %v179
    %v219 = vunpack.c.l.b16 %v180
    %v220 = vunpack.c.l.b16 %v181
    %v221 = vunpack.c.l.b16 %v182
    %v222 = vunpack.c.l.b16 %v183
    %v223 = vunpack.c.l.b16 %v184
    %v224 = vunpack.c.l.b16 %v185
    %v225 = vunpack.c.l.b16 %v186
    %v226 = vunpack.c.l.b16 %v187
    %v227 = vpack.c.b16 %v212, %v211
    %v228 = vpack.c.b16 %v214, %v213
    %v229 = vpack.c.b16 %v216, %v215
    %v230 = vpack.c.b16 %v218, %v217
    %v231 = vpack.c.b16 %v220, %v219
    %v232 = vpack.c.b16 %v222, %v221
    %v233 = vpack.c.b16 %v224, %v223
    %v234 = vpack.c.b16 %v226, %v225
    %243 = vmatprep.subr.bf16.mxu0 0
    %244 = vmatpush1.bf16.msra.mxu0 %v234
    %245 = vmatprep.subr.bf16.mxu0 0
    %246 = vmatpush1.bf16.msra.mxu0 %v233
    %247 = vmatprep.subr.bf16.mxu0 0
    %248 = vmatpush1.bf16.msra.mxu0 %v232
    %249 = vmatprep.subr.bf16.mxu0 0
    %250 = vmatpush1.bf16.msra.mxu0 %v231
    %251 = vmatprep.subr.bf16.mxu0 0
    %252 = vmatpush1.bf16.msra.mxu0 %v230
    %253 = vmatprep.subr.bf16.mxu0 0
    %254 = vmatpush1.bf16.msra.mxu0 %v229
    %255 = vmatprep.subr.bf16.mxu0 0
    %256 = vmatpush1.bf16.msra.mxu0 %v228
    %257 = vmatprep.subr.bf16.mxu0 0
    %258 = vmatpush1.bf16.msra.mxu0 %v227
    %259 = vmatprep.subr.bf16.mxu0 0
    %260 = vmatpush2.bf16.msra.mxu0 0
    %261 = vmatprep.subr.bf16.mxu0 0
    %262 = vmatpush2.bf16.msra.mxu0 0
    %263 = vmatprep.subr.bf16.mxu0 0
    %264 = vmatpush2.bf16.msra.mxu0 0
    %265 = vmatprep.subr.bf16.mxu0 0
    %266 = vmatpush2.bf16.msra.mxu0 0
    %267 = vmatprep.subr.bf16.mxu0 0
    %268 = vmatpush2.bf16.msra.mxu0 0
    %269 = vmatprep.subr.bf16.mxu0 0
    %270 = vmatpush2.bf16.msra.mxu0 0
    %271 = vmatprep.subr.bf16.mxu0 0
    %272 = vmatpush2.bf16.msra.mxu0 0
    %273 = vmatprep.subr.bf16.mxu0 0
    %274 = vmatpush2.bf16.msra.mxu0 0
    %275 = vmatprep.mubr.bf16.mxu0 0
    %276 = vmatmul.mubr.bf16.gmra.mxu0 %v171
    %v277 = vpop.f32.mrf.mxu0
    %v278 = vadd.f32 %v193, %v277
    %v279 = vpop.f32.mrf.mxu0
    %v280 = vpop.f32.mrf.mxu0
    %v281 = vadd.f32 %v193, %v280
    %v282 = vpop.f32.mrf.mxu0
    %283 = vdwg.mxu0
    %284 = vmax.xlane.f32.xlu0 %v278
    %v285 = vpop.xlane.xlu0 %284
    %286 = vmax.xlane.f32.xlu0 %v281
    %v287 = vpop.xlane.xlu0 %286
    %v288 = vsub.f32 %v278, %v285
    %v289 = vsub.f32 %v281, %v287
    %v290 = vmul.f32 %v288, 1.442695
    %v291 = vpow.pop %v290
    %v292 = vmul.f32 %v289, 1.442695
    %v293 = vpow.pop %v292
    %294 = vadd.xlane.f32.xlu0 %v291
    %v295 = vpop.xlane.xlu0 %294
    %296 = vadd.xlane.f32.xlu0 %v293
    %v297 = vpop.xlane.xlu0 %296
    %v298 = vrcp.pop %v295
    %v299 = vrcp.pop %v297
    %v300 = vmul.f32 %v291, %v298
    %v301 = vmul.f32 %v293, %v299
    %302 = vst [vmem:[%s5] sm:$0xff] %v300
    %303 = vst [vmem:[%s5 + $0x8] sm:$0xff] %v301
    // Predicated region
    $region30: #{policy_net_forward.1} parent=1 // pred_check
      _
    $region31: #{policy_net_forward.1} parent=1 // pred_check_branch
      %305 = sbr.rel (0) target = $region33
    $region32: #{policy_net_forward.1} parent=1 // pred_region
      _
    $region33: #{policy_net_forward.1} parent=1 // pred_fallthru
      _
    // Predicated region
    $region34: #{policy_net_forward.1} parent=1 // pred_check
      _
    $region35: #{policy_net_forward.1} parent=1 // pred_check_branch
      %307 = sbr.rel (0) target = $region37
    $region36: #{policy_net_forward.1} parent=1 // pred_region
      _
    $region37: #{policy_net_forward.1} parent=1 // pred_fallthru
      _
    %308 = vsyncpa [#allocation3], 1
    %309 = vsyncpa [#allocation5], 1

</llo_original>
